<compile_context>
chip_gen: v6e
topology: v6e:2x2x1
jax: 0.10.0
libtpu: 0.0.40
codegen_flags: <defaults>
</compile_context>

<pallas_src>
import functools

import jax
import jax.numpy as jnp
from jax.experimental import pallas as pl
from jax.experimental.pallas import tpu as pltpu


def _round_up(x, m):
    return ((x + m - 1) // m) * m


def label_smoothing_loss_kernel(pred_ref, target_ref, weight_ref, o_ref, *,
                                true_batch, tile_rows, confidence, smooth_val):
    # pred_ref:   (TB, C) logits (input dtype; upcast here)
    # target_ref: (TB, 1) int32 class indices
    # weight_ref: (1, C)  per-class weights (all ones when weight=None)
    # o_ref:      (8, 128) f32 lane-dense block; tile partial sum at [0, 0], zeros elsewhere
    i = pl.program_id(0)

    logits = pred_ref[...].astype(jnp.float32)                    # (TB, C)
    tb, C = logits.shape

    # Row-validity mask for the (padded) last tile; force invalid rows' logits
    # to 0 BEFORE exp so padding never produces inf/nan.
    row = jax.lax.broadcasted_iota(jnp.int32, (tb, 1), 0) + i * tile_rows
    valid = row < true_batch                                       # (TB, 1)
    logits = jnp.where(valid, logits, 0.0)

    # Numerically stable logsumexp along the lane (class) axis; logp = z - lse.
    m = jnp.max(logits, axis=-1, keepdims=True)                    # (TB, 1)
    z = logits - m
    lse = jnp.log(jnp.sum(jnp.exp(z), axis=-1, keepdims=True))     # (TB, 1)

    # Smoothed one-hot * weight via an iota compare (VPU, no scatter/gather).
    col = jax.lax.broadcasted_iota(jnp.int32, (tb, C), 1)
    tgt = target_ref[...]                                          # (TB, 1) int32
    w = weight_ref[...].astype(jnp.float32)                        # (1, C)
    tdw = jnp.where(col == tgt, confidence * w, smooth_val * w)    # (TB, C)

    # -sum(tdw * (z - lse)) == lse * sum(tdw) - sum(tdw * z): skips materializing logp.
    s_w = jnp.sum(tdw, axis=-1, keepdims=True)                     # (TB, 1)
    per_row = lse * s_w - jnp.sum(tdw * z, axis=-1, keepdims=True) # (TB, 1)
    per_row = jnp.where(valid, per_row, 0.0)

    tile_sum = jnp.sum(per_row)                                    # scalar partial sum
    r8 = jax.lax.broadcasted_iota(jnp.int32, o_ref.shape, 0)
    c128 = jax.lax.broadcasted_iota(jnp.int32, o_ref.shape, 1)
    o_ref[...] = jnp.where((r8 == 0) & (c128 == 0), tile_sum, 0.0)


def label_smoothing_loss(pred, target, *, classes, smoothing=0.1, weight=None):
    """pred: (B, C) float logits; target: (B,) int labels; optional weight: (C,)."""
    B, C = pred.shape
    assert C == classes, "classes must match pred.shape[-1]"
    confidence = 1.0 - smoothing
    smooth_val = smoothing / (classes - 1)

    itemsize = jnp.dtype(pred.dtype).itemsize
    # Batch tile: as large as is useful for streaming (~0.35us/step amortization),
    # while keeping the double-buffered pred block <= ~16 MiB so it fits the
    # scoped-VMEM budget on every generation (v5e 16 MiB default, v7x 64 MiB phys).
    per_buffer_budget = 8 * 1024 * 1024
    tb = per_buffer_budget // max(1, C * itemsize)
    tb = max(8, min(1024, (tb // 8) * 8))
    tb = min(tb, _round_up(B, 8))

    num_tiles = pl.cdiv(B, tb)
    b_pad = num_tiles * tb

    pred_p = pred if b_pad == B else jnp.pad(pred, ((0, b_pad - B), (0, 0)))
    tgt2d = target.astype(jnp.int32).reshape(B, 1)
    tgt_p = tgt2d if b_pad == B else jnp.pad(tgt2d, ((0, b_pad - B), (0, 0)))
    if weight is None:
        w2d = jnp.ones((1, C), dtype=jnp.float32)
    else:
        w2d = weight.astype(jnp.float32).reshape(1, C)

    kernel = functools.partial(
        label_smoothing_loss_kernel,
        true_batch=B, tile_rows=tb,
        confidence=confidence, smooth_val=smooth_val)

    # Explicit VMEM limit sized to what we actually use (double-buffered blocks +
    # headroom), capped so it is valid on all of v5e/v6e/v7x.
    vmem_needed = (2 * (tb * C * itemsize + tb * 4 + 8 * 128 * 4)
                   + C * 4 + (2 << 20))
    vmem_limit = int(min(max(vmem_needed, 4 << 20), 32 << 20))

    cost = pl.CostEstimate(
        flops=6 * B * C,
        transcendentals=B * C,
        bytes_accessed=B * C * itemsize + B * 4 + C * 4 + num_tiles * 8 * 128 * 4)

    partial = pl.pallas_call(
        kernel,
        out_shape=jax.ShapeDtypeStruct((num_tiles * 8, 128), jnp.float32),
        grid_spec=pltpu.PrefetchScalarGridSpec(
            num_scalar_prefetch=0,
            grid=(num_tiles,),
            in_specs=[
                pl.BlockSpec((tb, C), lambda i: (i, 0)),
                pl.BlockSpec((tb, 1), lambda i: (i, 0)),
                pl.BlockSpec((1, C), lambda i: (0, 0)),   # constant index: fetched once
            ],
            out_specs=pl.BlockSpec((8, 128), lambda i: (i, 0)),
        ),
        compiler_params=pltpu.CompilerParams(
            dimension_semantics=("parallel",),
            vmem_limit_bytes=vmem_limit),
        cost_estimate=cost,
    )(pred_p, tgt_p, w2d)

    # Per-tile partial sums -> mean over the true batch size (module does loss.mean()).
    return jnp.sum(partial) * (1.0 / B)


def reference_label_smoothing_loss(pred, target, *, classes, smoothing=0.1, weight=None):
    confidence = 1.0 - smoothing
    logp = jax.nn.log_softmax(pred, axis=-1)
    true_dist = jnp.full_like(logp, smoothing / (classes - 1))
    true_dist = true_dist.at[jnp.arange(pred.shape[0]), target].set(confidence)
    if weight is not None:
        loss = -jnp.sum(true_dist * logp * weight[None, :], axis=-1)
    else:
        loss = -jnp.sum(true_dist * logp, axis=-1)
    return jnp.mean(loss)


if __name__ == "__main__":
    # Small shapes implied by the module: a batch of class logits.
    # B deliberately not a multiple of 8 to exercise the padding/masking path.
    B, C = 10, 32
    smoothing = 0.1

    key = jax.random.PRNGKey(0)
    kp, kt, kw = jax.random.split(key, 3)
    pred = jax.random.normal(kp, (B, C), dtype=jnp.float32)
    target = jax.random.randint(kt, (B,), 0, C, dtype=jnp.int32)
    weight = jax.random.uniform(kw, (C,), dtype=jnp.float32) + 0.5

    # Unweighted (weight=None in the module).
    out = label_smoothing_loss(pred, target, classes=C, smoothing=smoothing)
    jax.block_until_ready(out)
    ref = reference_label_smoothing_loss(pred, target, classes=C, smoothing=smoothing)
    assert out.shape == ()
    assert jnp.allclose(out, ref, atol=1e-5, rtol=1e-5), (out, ref)

    # Weighted path.
    out_w = label_smoothing_loss(pred, target, classes=C, smoothing=smoothing,
                                 weight=weight)
    jax.block_until_ready(out_w)
    ref_w = reference_label_smoothing_loss(pred, target, classes=C,
                                           smoothing=smoothing, weight=weight)
    assert jnp.allclose(out_w, ref_w, atol=1e-5, rtol=1e-5), (out_w, ref_w)

    print("KERNEL_OK")
</pallas_src>

<mosaic_0001>
module attributes {stable_mosaic.version = 11 : i64} {
  func.func @label_smoothing_loss_kernel(%arg0: i32, %arg1: memref<16x32xf32, #tpu.memory_space<vmem>>, %arg2: memref<16x1xi32, #tpu.memory_space<vmem>>, %arg3: memref<1x32xf32, #tpu.memory_space<vmem>>, %arg4: memref<8x128xf32, #tpu.memory_space<vmem>>) attributes {dimension_semantics = [#tpu.dimension_semantics<parallel>], iteration_bounds = array<i64: 1>, scalar_prefetch = 0 : i64, scratch_operands = 0 : i64, tpu.core_type = #tpu.core_type<tc>, window_params = [{transform_indices = @transform_0, window_bounds = array<i64: 16, 32>}, {transform_indices = @transform_1, window_bounds = array<i64: 16, 1>}, {pipeline_mode = #tpu.pipeline_mode<synchronous>, transform_indices = @transform_2, window_bounds = array<i64: 1, 32>}, {transform_indices = @transform_3, window_bounds = array<i64: 8, 128>}]} {
    %c0 = arith.constant 0 : index
    %c0_0 = arith.constant 0 : index
    %0 = vector.load %arg1[%c0, %c0_0] : memref<16x32xf32, #tpu.memory_space<vmem>>, vector<16x32xf32>
    %1 = tpu.iota {dimensions = array<i32: 0>} : vector<16x1xi32>
    %c16_i32 = arith.constant 16 : i32
    %2 = arith.muli %arg0, %c16_i32 : i32
    %3 = vector.broadcast %2 : i32 to vector<16x1xi32>
    %4 = arith.addi %1, %3 : vector<16x1xi32>
    %c10_i32 = arith.constant 10 : i32
    %5 = vector.broadcast %c10_i32 : i32 to vector<16x1xi32>
    %6 = arith.cmpi slt, %4, %5 : vector<16x1xi32>
    %cst = arith.constant 0.000000e+00 : f32
    %7 = vector.shape_cast %6 : vector<16x1xi1> to vector<16x1xi1>
    %8 = vector.broadcast %7 : vector<16x1xi1> to vector<16x32xi1>
    %9 = vector.broadcast %cst : f32 to vector<16x32xf32>
    %10 = arith.select %8, %0, %9 : vector<16x32xi1>, vector<16x32xf32>
    %cst_1 = arith.constant dense<0xFF800000> : vector<16xf32>
    %11 = vector.multi_reduction <maximumf>, %10, %cst_1 [1] : vector<16x32xf32> to vector<16xf32>
    %12 = vector.shape_cast %11 : vector<16xf32> to vector<16x1xf32>
    %13 = vector.broadcast %12 : vector<16x1xf32> to vector<16x32xf32>
    %14 = arith.subf %10, %13 : vector<16x32xf32>
    %15 = math.exp %14 : vector<16x32xf32>
    %cst_2 = arith.constant dense<0.000000e+00> : vector<16xf32>
    %16 = vector.multi_reduction <add>, %15, %cst_2 [1] : vector<16x32xf32> to vector<16xf32>
    %17 = vector.shape_cast %16 : vector<16xf32> to vector<16x1xf32>
    %18 = math.log %17 : vector<16x1xf32>
    %19 = tpu.iota {dimensions = array<i32: 1>} : vector<16x32xi32>
    %c0_3 = arith.constant 0 : index
    %c0_4 = arith.constant 0 : index
    %20 = vector.load %arg2[%c0_3, %c0_4] : memref<16x1xi32, #tpu.memory_space<vmem>>, vector<16x1xi32>
    %c0_5 = arith.constant 0 : index
    %c0_6 = arith.constant 0 : index
    %21 = vector.load %arg3[%c0_5, %c0_6] : memref<1x32xf32, #tpu.memory_space<vmem>>, vector<1x32xf32>
    %22 = vector.broadcast %20 : vector<16x1xi32> to vector<16x32xi32>
    %23 = arith.cmpi eq, %19, %22 : vector<16x32xi32>
    %cst_7 = arith.constant 0.899999976 : f32
    %24 = vector.broadcast %cst_7 : f32 to vector<1x32xf32>
    %25 = arith.mulf %24, %21 : vector<1x32xf32>
    %cst_8 = arith.constant 0.0032258064 : f32
    %26 = vector.broadcast %cst_8 : f32 to vector<1x32xf32>
    %27 = arith.mulf %26, %21 : vector<1x32xf32>
    %28 = vector.shape_cast %25 : vector<1x32xf32> to vector<1x32xf32>
    %29 = vector.broadcast %28 : vector<1x32xf32> to vector<16x32xf32>
    %30 = vector.shape_cast %27 : vector<1x32xf32> to vector<1x32xf32>
    %31 = vector.broadcast %30 : vector<1x32xf32> to vector<16x32xf32>
    %32 = arith.select %23, %29, %31 : vector<16x32xi1>, vector<16x32xf32>
    %cst_9 = arith.constant dense<0.000000e+00> : vector<16xf32>
    %33 = vector.multi_reduction <add>, %32, %cst_9 [1] : vector<16x32xf32> to vector<16xf32>
    %34 = vector.shape_cast %33 : vector<16xf32> to vector<16x1xf32>
    %35 = arith.mulf %18, %34 : vector<16x1xf32>
    %36 = arith.mulf %32, %14 : vector<16x32xf32>
    %cst_10 = arith.constant dense<0.000000e+00> : vector<16xf32>
    %37 = vector.multi_reduction <add>, %36, %cst_10 [1] : vector<16x32xf32> to vector<16xf32>
    %38 = vector.shape_cast %37 : vector<16xf32> to vector<16x1xf32>
    %39 = arith.subf %35, %38 : vector<16x1xf32>
    %cst_11 = arith.constant 0.000000e+00 : f32
    %40 = vector.broadcast %cst_11 : f32 to vector<16x1xf32>
    %41 = arith.select %6, %39, %40 : vector<16x1xi1>, vector<16x1xf32>
    %42 = vector.shape_cast %41 : vector<16x1xf32> to vector<1x16x1xf32>
    %cst_12 = arith.constant dense<0.000000e+00> : vector<1xf32>
    %43 = vector.multi_reduction <add>, %42, %cst_12 [1, 2] : vector<1x16x1xf32> to vector<1xf32>
    %44 = vector.shape_cast %43 : vector<1xf32> to vector<1x1x1xf32>
    %45 = vector.extract %44[0, 0, 0] : f32 from vector<1x1x1xf32>
    %46 = tpu.iota {dimensions = array<i32: 0>} : vector<8x128xi32>
    %47 = tpu.iota {dimensions = array<i32: 1>} : vector<8x128xi32>
    %c0_i32 = arith.constant 0 : i32
    %48 = vector.broadcast %c0_i32 : i32 to vector<8x128xi32>
    %49 = arith.cmpi eq, %46, %48 : vector<8x128xi32>
    %c0_i32_13 = arith.constant 0 : i32
    %50 = vector.broadcast %c0_i32_13 : i32 to vector<8x128xi32>
    %51 = arith.cmpi eq, %47, %50 : vector<8x128xi32>
    %52 = arith.andi %49, %51 : vector<8x128xi1>
    %cst_14 = arith.constant 0.000000e+00 : f32
    %53 = vector.broadcast %45 : f32 to vector<8x128xf32>
    %54 = vector.broadcast %cst_14 : f32 to vector<8x128xf32>
    %55 = arith.select %52, %53, %54 : vector<8x128xi1>, vector<8x128xf32>
    %c0_15 = arith.constant 0 : index
    %c0_16 = arith.constant 0 : index
    %56 = vector.load %arg4[%c0_15, %c0_16] : memref<8x128xf32, #tpu.memory_space<vmem>>, vector<8x128xf32>
    tpu.vector_store %arg4[%c0_15, %c0_16], %55 {strides = array<i32>} : memref<8x128xf32, #tpu.memory_space<vmem>>, vector<8x128xf32>,
    return
  }
  func.func @transform_0(%arg0: i32) -> (i32, i32) {
    %c0_i32 = arith.constant 0 : i32
    %c0_i32_0 = arith.constant 0 : i32
    return %arg0, %c0_i32 : i32, i32
  }
  func.func @transform_1(%arg0: i32) -> (i32, i32) {
    %c0_i32 = arith.constant 0 : i32
    %c0_i32_0 = arith.constant 0 : i32
    return %arg0, %c0_i32 : i32, i32
  }
  func.func @transform_2(%arg0: i32) -> (i32, i32) {
    %c0_i32 = arith.constant 0 : i32
    %c0_i32_0 = arith.constant 0 : i32
    %c0_i32_1 = arith.constant 0 : i32
    return %c0_i32, %c0_i32_0 : i32, i32
  }
  func.func @transform_3(%arg0: i32) -> (i32, i32) {
    %c0_i32 = arith.constant 0 : i32
    %c0_i32_0 = arith.constant 0 : i32
    return %arg0, %c0_i32 : i32, i32
  }
}

</mosaic_0001>

<llo_original>
// kernel: tpu_custom_call.1
$region0: #{tpu_custom_call.1}
  #allocation0 [shape = 'u32[]', space=smem, size = 0x4, offset = 0x4, fixed_abs, tag = 'smem constant byte address 0x4 - core index']
  #allocation1 [shape = 'u32[144,128]{1,0:T(1,128)}', space=vmem, size = 0x12000, scoped, tag = 'internal scratch']
  %s0 = inlined_call_operand.vmem [shape: f32[16,32], index: 0, kind: input, shape index: {}]
  %s1 = inlined_call_operand.vmem [shape: s32[16,1], index: 1, kind: input, shape index: {}]
  %s2 = inlined_call_operand.vmem [shape: f32[1,32], index: 2, kind: input, shape index: {}]
  %s3 = inlined_call_operand.hbm [shape: f32[8,128], index: 3, kind: output, shape index: {}]
  %s4 = sld [smem:[#allocation0]]
  $region22: #{tpu_custom_call.1} parent=0
    _
  %s6 = ssub.s32 1, %s4
  %s7 = scalar_select 0, %s6, %s4
  $region1: #{tpu_custom_call.1} parent=0
    #allocation2 [shape = 'u8[4096]{0}', space=vmem, size = 0x1000, scoped, tag = 'output window, operand 0, single buffered']
    #allocation3 [shape = 's32[1]{0}', space=sflag, size = 0x4, scoped, tag = 'scoped memory for tpu_custom_call.1']
    %8 = vsyncpa [#allocation3], 0
    // Predicated region
    $region2: #{tpu_custom_call.1} parent=1 // pred_check
      _
    $region3: #{tpu_custom_call.1} parent=1 // pred_check_branch
      %10 = sbr.rel (0) target = $region5
    $region4: #{tpu_custom_call.1} parent=1 // pred_region
      _
    $region5: #{tpu_custom_call.1} parent=1 // pred_fallthru
      _
    // Predicated region
    $region6: #{tpu_custom_call.1} parent=1 // pred_check
      _
    $region7: #{tpu_custom_call.1} parent=1 // pred_check_branch
      %12 = sbr.rel (0) target = $region9
    $region8: #{tpu_custom_call.1} parent=1 // pred_region
      _
    $region9: #{tpu_custom_call.1} parent=1 // pred_fallthru
      _
    // Predicated region
    $region10: #{tpu_custom_call.1} parent=1 // pred_check
      _
    $region11: #{tpu_custom_call.1} parent=1 // pred_check_branch
      %14 = sbr.rel (0) target = $region13
    $region12: #{tpu_custom_call.1} parent=1 // pred_region
      _
    $region13: #{tpu_custom_call.1} parent=1 // pred_fallthru
      _
    %v15 = vld [vmem:[%s0] sm:$0xff]
    %v16 = vld [vmem:[%s0 + $0x8] sm:$0xff]
    %v17 = vlaneseq
    %v18 = vshrl.u32 %v17, 7
    %v19 = vadd.s32 %v18, 8
    %s20 = smul.u32 0, 16
    %v21 = vstv %s20
    %v22 = vadd.s32 %v18, %v21
    %v23 = vadd.s32 %v19, %v21
    %vm24 = vcmp.lt.s32.totalorder %v22, 10
    %vm25 = vcmp.lt.s32.totalorder %v23, 10
    %v26 = vsel %vm24, 1, 0
    %v27 = vsel %vm25, 1, 0
    %vm28 = vcmp.eq.s32.totalorder %v26, 1
    %vm29 = vcmp.eq.s32.totalorder %v27, 1
    %v30 = vsel %vm28, %v15, 0.0
    %v31 = vsel %vm29, %v16, 0.0
    %vm32 = vcmask 261120
    %v33 = vsel %vm32, %v30, -inf
    %34 = vmax.xlane.f32.xlu0 %v33
    %v35 = vpop.xlane.xlu0 %34
    %v36 = vsel %vm32, %v31, -inf
    %37 = vmax.xlane.f32.xlu0 %v36
    %v38 = vpop.xlane.xlu0 %37
    %v39 = vsub.f32 %v30, %v35
    %v40 = vsub.f32 %v31, %v38
    %v41 = vmul.f32 %v39, 1.442695
    %v42 = vpow.pop %v41
    %v43 = vmul.f32 %v40, 1.442695
    %v44 = vpow.pop %v43
    %v45 = vsel %vm32, %v42, 0.0
    %46 = vadd.xlane.f32.xlu0 %v45
    %v47 = vpop.xlane.xlu0 %46
    %v48 = vsel %vm32, %v44, 0.0
    %49 = vadd.xlane.f32.xlu0 %v48
    %v50 = vpop.xlane.xlu0 %49
    %v51 = vlog2.pop %v47
    %v52 = vmul.f32 %v51, 0.6931472
    %v53 = vlog2.pop %v50
    %v54 = vmul.f32 %v53, 0.6931472
    %v55 = vlaneseq
    %v56 = vand.u32 %v55, 127
    %v57 = vld [vmem:[%s1] sm:$0xff]
    %v58 = vld [vmem:[%s1 + $0x8] sm:$0xff]
    %v59 = vld [vmem:[%s2] sm:$0x1]
    %60 = vset.pattern.permute.xlu0 0
    %61 = vperm.xlu0 %60, %v57
    %v62 = vpop.permute.xlu0 %61
    %63 = vset.pattern.permute.xlu0 0
    %64 = vperm.xlu0 %63, %v58
    %v65 = vpop.permute.xlu0 %64
    %vm66 = vcmp.eq.s32.totalorder %v56, %v62
    %vm67 = vcmp.eq.s32.totalorder %v56, %v65
    %v68 = vmul.f32 %v59, 0.9
    %v69 = vmul.f32 %v59, 0.0032258064
    %v71 = vlaneseq
    %v72 = vshrl.u32 %v71, 7
    %v73 = vsub.s32 0, %v72
    %v74 = vrot.slane %v68, %v73
    %v77 = vlaneseq
    %v78 = vshrl.u32 %v77, 7
    %v79 = vsub.s32 0, %v78
    %v80 = vrot.slane %v69, %v79
    %v82 = vsel %vm66, %v74, %v80
    %v83 = vsel %vm67, %v74, %v80
    %v84 = vsel %vm32, %v82, 0.0
    %85 = vadd.xlane.f32.xlu0 %v84
    %v86 = vpop.xlane.xlu0 %85
    %v87 = vsel %vm32, %v83, 0.0
    %88 = vadd.xlane.f32.xlu0 %v87
    %v89 = vpop.xlane.xlu0 %88
    %v90 = vmul.f32 %v52, %v86
    %v91 = vmul.f32 %v54, %v89
    %v92 = vmul.f32 %v82, %v39
    %v93 = vmul.f32 %v83, %v40
    %v94 = vsel %vm32, %v92, 0.0
    %95 = vadd.xlane.f32.xlu0 %v94
    %v96 = vpop.xlane.xlu0 %95
    %v97 = vsel %vm32, %v93, 0.0
    %98 = vadd.xlane.f32.xlu0 %v97
    %v99 = vpop.xlane.xlu0 %98
    %v100 = vsub.f32 %v90, %v96
    %v101 = vsub.f32 %v91, %v99
    %v102 = vsel %vm24, %v100, 0.0
    %v103 = vsel %vm25, %v101, 0.0
    %vm104 = vcmask 7168
    %v105 = vsel %vm104, %v102, 0.0
    %v106 = vsel %vm104, %v103, 0.0
    %v107 = vadd.f32 %v105, %v106
    %108 = vadd.xlane.f32.xlu0 %v107
    %v109 = vpop.xlane.xlu0 %108
    %v110 = vrot.slane %v109, 4
    %v111 = vadd.f32 %v109, %v110
    %v112 = vrot.slane %v111, 2
    %v113 = vadd.f32 %v111, %v112
    %v114 = vrot.slane %v113, 1
    %v115 = vadd.f32 %v113, %v114
    %s116 = vtos %v115
    %vm117 = vcmp.eq.s32.totalorder %v18, 0
    %vm118 = vcmp.eq.s32.totalorder %v56, 0
    %vm119 = vmand %vm117, %vm118
    %v120 = vstv %s116
    %v121 = vsel %vm119, %v120, 0.0
    %122 = vst [vmem:[#allocation2] sm:$0xff] %v121
    // Predicated region
    $region14: #{tpu_custom_call.1} parent=1 // pred_check
      _
    $region15: #{tpu_custom_call.1} parent=1 // pred_check_branch
      %124 = sbr.rel (0) target = $region17
    $region16: #{tpu_custom_call.1} parent=1 // pred_region
      %s126 = ssub.s32 128, 128
      %127 = vsyncadd [#allocation3], %s126
      %s129 = sshll.u32 [#allocation2], 4
      %s130 = int_to_ptr.vmem [resolvable:$true] %s129
      %132 = dma.vmem_to_hbm [thread:$0]  %s130, 128, %s3, [#allocation3]
    $region17: #{tpu_custom_call.1} parent=1 // pred_fallthru
      _
    // Predicated region
    $region18: #{tpu_custom_call.1} parent=1 // pred_check
      _
    $region19: #{tpu_custom_call.1} parent=1 // pred_check_branch
      %134 = sbr.rel (0) target = $region21
    $region20: #{tpu_custom_call.1} parent=1 // pred_region
      %135 = dma.done [#allocation3], 128
    $region21: #{tpu_custom_call.1} parent=1 // pred_fallthru
      _
    %136 = vsyncpa [#allocation3], 1

</llo_original>
